<compile_context>
chip_gen: v7x
topology: tpu7x:2x2x1
jax: 0.10.0
libtpu: 0.0.40
codegen_flags: <defaults>
</compile_context>

<pallas_src>
import functools
import numpy as np
import jax
import jax.numpy as jnp
from jax.experimental import pallas as pl
from jax.experimental.pallas import tpu as pltpu

ACT_DTYPE = jnp.bfloat16      # activations carried across kernel boundaries
WEIGHT_DTYPE = jnp.bfloat16   # MXU compute dtype
LOGIT_DTYPE = jnp.float32


def _round_up(x, m):
    return ((x + m - 1) // m) * m


# ----------------------- generic tiled linear (MXU) -------------------------

def _linear_tiled_kernel(x_ref, w_ref, b_ref, o_ref, acc_ref):
    k = pl.program_id(2)

    @pl.when(k == 0)
    def _():
        acc_ref[...] = jnp.zeros_like(acc_ref)

    acc_ref[...] += jnp.dot(x_ref[...].astype(WEIGHT_DTYPE),
                            w_ref[...].astype(WEIGHT_DTYPE),
                            preferred_element_type=jnp.float32)

    @pl.when(k == pl.num_programs(2) - 1)
    def _():
        o_ref[...] = (acc_ref[...] + b_ref[...]).astype(o_ref.dtype)


def pallas_linear(x, w, b, tm_cap=256, tn_cap=512, tk_cap=1024):
    """y = x @ w + b with K-axis accumulation in an f32 VMEM scratch.

    Tile caps are MXU-native multiples of 256 (v6e/v7x).  Operands are expected
    to be pre-padded at init, so the jnp.pad fallback stays dormant in the hot
    path; small problems run as a single full block, grid=(1,1,1)."""
    M, K = x.shape
    N = w.shape[1]
    tm, Mp = (M, M) if M <= tm_cap else (tm_cap, _round_up(M, tm_cap))
    tn, Np = (N, N) if N <= tn_cap else (tn_cap, _round_up(N, tn_cap))
    tk, Kp = (K, K) if K <= tk_cap else (tk_cap, _round_up(K, tk_cap))
    xp = x if (Mp == M and Kp == K) else jnp.pad(x, ((0, Mp - M), (0, Kp - K)))
    wp = w if (Kp == K and Np == N) else jnp.pad(w, ((0, Kp - K), (0, Np - N)))
    bp = b if Np == N else jnp.pad(b, ((0, Np - N),))
    out = pl.pallas_call(
        _linear_tiled_kernel,
        out_shape=jax.ShapeDtypeStruct((Mp, Np), LOGIT_DTYPE),
        grid=(Mp // tm, Np // tn, Kp // tk),
        in_specs=[
            pl.BlockSpec((tm, tk), lambda i, j, k: (i, k)),
            pl.BlockSpec((tk, tn), lambda i, j, k: (k, j)),
            pl.BlockSpec((1, tn), lambda i, j, k: (0, j)),
        ],
        out_specs=pl.BlockSpec((tm, tn), lambda i, j, k: (i, j)),
        scratch_shapes=[pltpu.VMEM((tm, tn), jnp.float32)],
        compiler_params=pltpu.CompilerParams(
            dimension_semantics=("parallel", "parallel", "arbitrary")),
    )(xp, wp, bp.reshape(1, Np))
    if Mp != M or Np != N:
        out = out[:M, :N]
    return out


# ------------------------- fused, tiled TwoMLPHead ---------------------------

def _two_mlp_head_kernel(x_ref, w6_ref, b6_ref, w7_ref, b7_ref, o_ref, acc_ref):
    k = pl.program_id(1)

    @pl.when(k == 0)
    def _():
        acc_ref[...] = jnp.zeros_like(acc_ref)

    acc_ref[...] += jnp.dot(x_ref[...].astype(WEIGHT_DTYPE), w6_ref[...],
                            preferred_element_type=jnp.float32)

    @pl.when(k == pl.num_programs(1) - 1)
    def _():
        h = jnp.maximum(acc_ref[...] + b6_ref[...], 0.0)      # fc6 + ReLU
        y = jnp.dot(h.astype(WEIGHT_DTYPE), w7_ref[...],
                    preferred_element_type=jnp.float32) + b7_ref[...]
        o_ref[...] = jnp.maximum(y, 0.0).astype(o_ref.dtype)  # fc7 + ReLU


def two_mlp_head(x, p, tm_cap=256, tk_cap=512):
    """Fused fc6+ReLU+fc7+ReLU.  fc6 is K-tiled into an f32 VMEM accumulator and
    fc7 runs in the last-k epilogue, so the intermediate never touches HBM and
    VMEM stays bounded at production pooled dims (256*7*7)."""
    x = x.reshape(x.shape[0], -1)
    M, K = x.shape
    D = p["fc7_w"].shape[1]
    tm, Mp = (M, M) if M <= tm_cap else (tm_cap, _round_up(M, tm_cap))
    tk, Kp = (K, K) if K <= tk_cap else (tk_cap, _round_up(K, tk_cap))
    xp = x if (Mp == M and Kp == K) else jnp.pad(x, ((0, Mp - M), (0, Kp - K)))
    w6 = p["fc6_w"] if Kp == K else jnp.pad(p["fc6_w"], ((0, Kp - K), (0, 0)))
    out = pl.pallas_call(
        _two_mlp_head_kernel,
        out_shape=jax.ShapeDtypeStruct((Mp, D), ACT_DTYPE),
        grid=(Mp // tm, Kp // tk),
        in_specs=[
            pl.BlockSpec((tm, tk), lambda i, k: (i, k)),
            pl.BlockSpec((tk, D), lambda i, k: (k, 0)),
            pl.BlockSpec((1, D), lambda i, k: (0, 0)),     # b6 (resident)
            pl.BlockSpec((D, D), lambda i, k: (0, 0)),     # w7 (resident)
            pl.BlockSpec((1, D), lambda i, k: (0, 0)),     # b7 (resident)
        ],
        out_specs=pl.BlockSpec((tm, D), lambda i, k: (i, 0)),
        scratch_shapes=[pltpu.VMEM((tm, D), jnp.float32)],
        compiler_params=pltpu.CompilerParams(
            dimension_semantics=("parallel", "arbitrary")),
    )(xp, w6, p["fc6_b"], p["fc7_w"], p["fc7_b"])
    return out if Mp == M else out[:M]


# -------------- whole transformer encoder as ONE pallas_call -----------------

def _encoder_layers_kernel(x_ref, mask_ref,
                           wq_ref, bq_ref, wk_ref, bk_ref, wv_ref, bv_ref,
                           wo_ref, bo_ref, ln1g_ref, ln1b_ref,
                           wf1_ref, bf1_ref, wf2_ref, bf2_ref,
                           ln2g_ref, ln2b_ref,
                           o_ref, act_ref, *, S, D, H, eps):
    layer = pl.program_id(1)
    Dh = D // H
    scale = 1.0 / float(np.sqrt(Dh))

    # Seed the VMEM-resident 2-D running activation on the first layer of each
    # sequence; it is carried in f32 across the inner ("arbitrary") layer axis.
    @pl.when(layer == 0)
    def _():
        act_ref[...] = x_ref[0].astype(jnp.float32)

    x2 = act_ref[...]                               # [S, D] f32
    mask = mask_ref[0]                              # [1, S] additive (0 / -1e9) f32

    def layer_norm(v, g_ref, b_ref):
        mu = jnp.mean(v, axis=-1, keepdims=True)
        var = jnp.mean((v - mu) ** 2, axis=-1, keepdims=True)
        return (v - mu) * jax.lax.rsqrt(var + eps) * g_ref[0] + b_ref[0]

    # ---- multi-head self attention (all heads batched, fully in VMEM) ----
    xb = x2.astype(WEIGHT_DTYPE)
    q = jnp.dot(xb, wq_ref[0], preferred_element_type=jnp.float32) + bq_ref[0]
    k = jnp.dot(xb, wk_ref[0], preferred_element_type=jnp.float32) + bk_ref[0]
    v = jnp.dot(xb, wv_ref[0], preferred_element_type=jnp.float32) + bv_ref[0]

    def split_heads(t):                             # [S, D] -> [H, S, Dh]
        return jnp.stack([t[:, h * Dh:(h + 1) * Dh] for h in range(H)], axis=0)

    qh = split_heads(q).astype(WEIGHT_DTYPE)
    kh = split_heads(k).astype(WEIGHT_DTYPE)
    vh = split_heads(v).astype(WEIGHT_DTYPE)

    # Single batched-over-heads contraction, one mask add, one softmax
    # (replaces the per-head Python loop / per-head mask broadcasts).
    s = jnp.einsum('hqd,hkd->hqk', qh, kh,
                   preferred_element_type=jnp.float32) * scale      # [H, S, S]
    s = s + mask                                    # key-padding mask, broadcast once
    s = s - jnp.max(s, axis=-1, keepdims=True)
    p = jnp.exp(s)
    p = p * pl.reciprocal(jnp.sum(p, axis=-1, keepdims=True), approx=True)
    ah = jnp.einsum('hqk,hkd->hqd', p.astype(WEIGHT_DTYPE), vh,
                    preferred_element_type=jnp.float32)             # [H, S, Dh]
    attn = jnp.concatenate([ah[h] for h in range(H)], axis=-1)      # [S, D]

    attn = jnp.dot(attn.astype(WEIGHT_DTYPE), wo_ref[0],
                   preferred_element_type=jnp.float32) + bo_ref[0]

    # residual + LayerNorm 1 (fused)
    y = layer_norm(x2 + attn, ln1g_ref, ln1b_ref)

    # feed-forward (ReLU)
    h1 = jnp.dot(y.astype(WEIGHT_DTYPE), wf1_ref[0],
                 preferred_element_type=jnp.float32) + bf1_ref[0]
    h1 = jnp.maximum(h1, 0.0)
    h2 = jnp.dot(h1.astype(WEIGHT_DTYPE), wf2_ref[0],
                 preferred_element_type=jnp.float32) + bf2_ref[0]

    # residual + LayerNorm 2 (fused)
    z = layer_norm(y + h2, ln2g_ref, ln2b_ref)
    act_ref[...] = z

    @pl.when(layer == pl.num_programs(1) - 1)
    def _():
        o_ref[0] = z.astype(o_ref.dtype)
    # TODO(synk): dropout layers of TransformerEncoderLayer omitted (inference semantics).


def pallas_transformer_encoder(src_bsd, mask_add, enc, nhead, eps=1e-5,
                               vmem_limit_bytes=48 * 1024 * 1024):
    """src_bsd: [B, S, D] bf16; mask_add: [B, 1, S] additive key-padding mask (f32)."""
    B, S, D = src_bsd.shape
    L = enc["wq"].shape[0]
    FFN = enc["wf1"].shape[2]

    def per_layer(a, b):
        return pl.BlockSpec((1, a, b), lambda bb, l: (l, 0, 0))

    def per_batch(a, b):
        return pl.BlockSpec((1, a, b), lambda bb, l: (bb, 0, 0))

    kernel = functools.partial(_encoder_layers_kernel, S=S, D=D, H=nhead, eps=eps)
    # TODO(synk): at production dims on v7x (64 MiB VMEM) stream w_ff1/w_ff2 in
    # K-chunks (extra grid axis or inner emit_pipeline) instead of whole-layer blocks.
    return pl.pallas_call(
        kernel,
        out_shape=jax.ShapeDtypeStruct((B, S, D), ACT_DTYPE),
        grid=(B, L),                    # batch parallel (2nd TC on v7x) x layers sequential
        in_specs=[
            per_batch(S, D),                        # src sequence
            per_batch(1, S),                        # additive mask
            per_layer(D, D), per_layer(1, D),       # wq, bq
            per_layer(D, D), per_layer(1, D),       # wk, bk
            per_layer(D, D), per_layer(1, D),       # wv, bv
            per_layer(D, D), per_layer(1, D),       # w_out, b_out
            per_layer(1, D), per_layer(1, D),       # ln1 gamma / beta
            per_layer(D, FFN), per_layer(1, FFN),   # w_ff1, b_ff1
            per_layer(FFN, D), per_layer(1, D),     # w_ff2, b_ff2
            per_layer(1, D), per_layer(1, D),       # ln2 gamma / beta
        ],
        out_specs=per_batch(S, D),
        scratch_shapes=[pltpu.VMEM((S, D), jnp.float32)],   # running activation
        compiler_params=pltpu.CompilerParams(
            dimension_semantics=("parallel", "arbitrary"),
            vmem_limit_bytes=vmem_limit_bytes),
    )(src_bsd, mask_add,
      enc["wq"], enc["bq"], enc["wk"], enc["bk"], enc["wv"], enc["bv"],
      enc["wo"], enc["bo"], enc["ln1_g"], enc["ln1_b"],
      enc["wf1"], enc["bf1"], enc["wf2"], enc["bf2"],
      enc["ln2_g"], enc["ln2_b"])


# ----------------------------- box utilities --------------------------------

def resize_boxes(boxes, original_size, new_size):
    ratio_h = float(new_size[0]) / float(original_size[0])
    ratio_w = float(new_size[1]) / float(original_size[1])
    xmin, ymin, xmax, ymax = boxes[:, 0], boxes[:, 1], boxes[:, 2], boxes[:, 3]
    return jnp.stack((xmin * ratio_w, ymin * ratio_h, xmax * ratio_w, ymax * ratio_h), axis=1)


def get_normalize_boxes_feature(boxes, original_size):
    ratio_h = 1.0 / float(original_size[0])
    ratio_w = 1.0 / float(original_size[1])
    xmin, ymin, xmax, ymax = boxes[:, 0], boxes[:, 1], boxes[:, 2], boxes[:, 3]
    xmin = xmin * ratio_w
    xmax = xmax * ratio_w
    ymin = ymin * ratio_h
    ymax = ymax * ratio_h
    w = xmax - xmin
    h = ymax - ymin
    a = w * h
    return jnp.stack((xmin, ymin, xmax, ymax, w, h, a), axis=1)


# ------------------------------ parameter init -------------------------------

def _dense(key, fan_in, fan_out):
    kw, kb = jax.random.split(key)
    w = (jax.random.normal(kw, (fan_in, fan_out), jnp.float32) * 0.02).astype(WEIGHT_DTYPE)
    b = jax.random.normal(kb, (fan_out,), jnp.float32) * 0.02
    return w, b


def init_params(key, pooled_dim, D, ffn, n_layers, roi_cls, text_cls):
    keys = iter(jax.random.split(key, 256))

    def dense(fi, fo):
        return _dense(next(keys), fi, fo)

    def head(fi, fo):
        w6, b6 = dense(fi, fo)
        w7, b7 = dense(fo, fo)
        return {"fc6_w": w6, "fc6_b": b6.reshape(1, fo),
                "fc7_w": w7, "fc7_b": b7.reshape(1, fo)}

    params = {
        "box_head": head(pooled_dim, D),
        "feature_head": head(pooled_dim, D),
        "box_location_head": head(7, D),
        "special_embedding": (jax.random.normal(next(keys), (D,), jnp.float32) * 0.02
                              ).astype(ACT_DTYPE),
    }

    # Encoder weights stacked over layers; Q/K/V kept separate so the kernel
    # never slices a fused projection at arbitrary lane offsets.
    stacks = {k: [] for k in ("wq", "bq", "wk", "bk", "wv", "bv", "wo", "bo",
                              "ln1_g", "ln1_b", "wf1", "bf1", "wf2", "bf2",
                              "ln2_g", "ln2_b")}
    for _ in range(n_layers):
        for name in ("q", "k", "v", "o"):
            w, b = dense(D, D)
            stacks["w" + name].append(w)
            stacks["b" + name].append(b.reshape(1, D))
        wf1, bf1 = dense(D, ffn)
        wf2, bf2 = dense(ffn, D)
        stacks["wf1"].append(wf1)
        stacks["bf1"].append(bf1.reshape(1, ffn))
        stacks["wf2"].append(wf2)
        stacks["bf2"].append(bf2.reshape(1, D))
        stacks["ln1_g"].append(jnp.ones((1, D), jnp.float32))
        stacks["ln1_b"].append(jnp.zeros((1, D), jnp.float32))
        stacks["ln2_g"].append(jnp.ones((1, D), jnp.float32))
        stacks["ln2_b"].append(jnp.zeros((1, D), jnp.float32))
    params["encoder"] = {k: jnp.stack(v, axis=0) for k, v in stacks.items()}

    # ROI + text classifiers fused into one 256-lane weight (each head padded to
    # 128 lanes -> lane-dense stores); logits sliced back on the host.
    roi_w, roi_b = dense(D, roi_cls)
    txt_w, txt_b = dense(D, text_cls)
    cls_w = jnp.zeros((D, 256), WEIGHT_DTYPE)
    cls_w = cls_w.at[:, :roi_cls].set(roi_w).at[:, 128:128 + text_cls].set(txt_w)
    cls_b = jnp.zeros((256,), jnp.float32)
    cls_b = cls_b.at[:roi_cls].set(roi_b).at[128:128 + text_cls].set(txt_b)
    params["cls_w"], params["cls_b"] = cls_w, cls_b
    return params


# ------------------------------- forward pass --------------------------------

def faster_rcnn_feature_cls_forward(params, images, boxes_per_image,
                                    pooled_box_feats_per_image, pooled_img_feats,
                                    max_seq_length, roi_cls_num, text_cls_num, nhead):
    D = params["special_embedding"].shape[0]
    B = len(images)
    S = max_seq_length
    S_pad = _round_up(S, 8)          # sublane-aligned sequence for the encoder

    original_image_sizes, img_locations = [], []
    for img in images:
        h, w = img.shape[-2:]
        original_image_sizes.append((h, w))
        img_locations.append([0, 0, 1, 1, 1, 1, 1])
    img_locations = jnp.asarray(img_locations, jnp.float32)

    # TODO(synk): GeneralizedRCNNTransform (resize+normalize) omitted; image_sizes == original sizes.
    image_sizes = original_image_sizes

    # TODO(synk): ResNet-50-FPN backbone + MultiScaleRoIAlign have no clean small
    # Pallas equivalent; pooled ROI / whole-image features are synthetic inputs.
    n_per_image = [int(b.shape[0]) for b in boxes_per_image]
    N_total = sum(n_per_image)
    boxes_locations = []
    for ti, tgt_boxes in enumerate(boxes_per_image):
        _ = resize_boxes(tgt_boxes, list(original_image_sizes[ti]), list(image_sizes[ti]))
        boxes_locations.append(get_normalize_boxes_feature(tgt_boxes, list(original_image_sizes[ti])))
    boxes_locations = jnp.concatenate(boxes_locations, axis=0)                 # [N, 7]
    pooled_boxes = jnp.concatenate(pooled_box_feats_per_image, axis=0).astype(ACT_DTYPE)

    # Batched MLP heads: one fused pallas_call each (bf16 leaves each kernel);
    # both location inputs share one call.
    all_locations = jnp.concatenate([boxes_locations, img_locations], axis=0)  # [N+B, 7]
    loc_feats = two_mlp_head(all_locations, params["box_location_head"])       # [N+B, D]
    box_location_features = loc_feats[:N_total]
    img_location_features = loc_feats[N_total:]
    box_features = two_mlp_head(pooled_boxes, params["box_head"])              # [N, D]
    img_features = two_mlp_head(pooled_img_feats.astype(ACT_DTYPE),
                                params["feature_head"])                        # [B, D]
    img_features = img_features + img_location_features
    box_full = box_features + box_location_features                            # [N, D]

    # --------- sequence assembly: single gather from a feature table ----------
    table = jnp.concatenate(
        [img_features, box_full, params["special_embedding"].reshape(1, D),
         jnp.zeros((1, D), ACT_DTYPE)], axis=0)                                 # [B+N+2, D]
    SPECIAL = B + N_total
    PAD = SPECIAL + 1
    gather_idx = np.full((B, S_pad), PAD, dtype=np.int32)
    mask_np = np.zeros((B, S_pad), dtype=bool)
    mask_np[:, S:] = True                          # alignment padding is always masked
    text_ids = []
    text_num, offset = 0, 0
    for b in range(B):
        n = n_per_image[b]
        gather_idx[b, 0] = b
        if n >= S - 2:
            use = S - 2
            gather_idx[b, 1:1 + use] = B + offset + np.arange(use)
            gather_idx[b, 1 + use] = SPECIAL
            text_ids.append(list(range(text_num, text_num + S - 1)))
            text_num += S - 1
        else:
            gather_idx[b, 1:1 + n] = B + offset + np.arange(n)
            gather_idx[b, 1 + n] = SPECIAL
            mask_np[b, 2 + n:S] = True
            text_ids.append(list(range(text_num, text_num + n + 1)))
            text_num += n + 1
        offset += n
    src_bsd = jnp.take(table, jnp.asarray(gather_idx), axis=0)                  # [B, S_pad, D] bf16
    mask_add = jnp.asarray(
        np.where(mask_np, -1e9, 0.0).astype(np.float32))[:, None, :]            # [B, 1, S_pad]

    # ----------- whole 6-layer transformer encoder: ONE pallas_call -----------
    out_bsd = pallas_transformer_encoder(src_bsd, mask_add, params["encoder"], nhead)

    # ------- fused ROI + text classifier over all rows (no host transpose) ----
    logits_all = pallas_linear(out_bsd.reshape(B * S_pad, D),
                               params["cls_w"], params["cls_b"])                # [B*S_pad, 256]
    roi_rows = np.arange(B) * S_pad                                             # seq position 0
    ROI_logits = logits_all[jnp.asarray(roi_rows), :roi_cls_num]

    # Reproduce the PyTorch `.view(B,-1,D)` raw-memory quirk: batch-major active
    # indices select seq-major text rows.  Instead of transposing the whole
    # activation, statically remap those seq-major row ids into the batch-major
    # [B, S_pad] row layout.
    active = ~mask_np[:, 1:S].reshape(-1)                        # batch-major flatten
    active_idx = np.nonzero(active)[0]
    mapped = (active_idx % B) * S_pad + (active_idx // B) + 1    # -> rows of out_bsd flat
    active_all = logits_all[jnp.asarray(mapped), 128:128 + text_cls_num]
    active_text_logits = [active_all[idx[0]:idx[0] + len(idx) - 1] for idx in text_ids]
    return ROI_logits, active_text_logits


# ----------------------------------- main ------------------------------------

if __name__ == "__main__":
    key = jax.random.PRNGKey(0)

    D = 32            # representation_dim (divisible by nhead)
    NHEAD = 8
    FFN = 128         # TODO(synk): PyTorch default dim_feedforward=2048; shrunk for toy config.
    N_LAYERS = 6
    MAX_SEQ = 8
    ROI_CLS = 5
    TEXT_CLS = 6
    POOLED_DIM = 32   # stands in for backbone.out_channels * resolution**2
    B = 2
    n_boxes = [3, 7]  # second image exercises the truncation branch (7 >= MAX_SEQ-2)

    k_param, k_img, k_box, k_pb, k_pi = jax.random.split(key, 5)
    params = init_params(k_param, POOLED_DIM, D, FFN, N_LAYERS, ROI_CLS, TEXT_CLS)

    images = [jax.random.normal(jax.random.fold_in(k_img, i), (3, 16, 16), jnp.float32)
              for i in range(B)]
    boxes_per_image = []
    for i, n in enumerate(n_boxes):
        k1, k2 = jax.random.split(jax.random.fold_in(k_box, i))
        xy = jax.random.uniform(k1, (n, 2), jnp.float32, 0.0, 8.0)
        wh = jax.random.uniform(k2, (n, 2), jnp.float32, 1.0, 7.0)
        boxes_per_image.append(jnp.concatenate([xy, xy + wh], axis=1))
    pooled_box_feats = [jax.random.normal(jax.random.fold_in(k_pb, i), (n, POOLED_DIM), jnp.float32)
                        for i, n in enumerate(n_boxes)]
    pooled_img_feats = jax.random.normal(k_pi, (B, POOLED_DIM), jnp.float32)

    roi_logits, active_text_logits = faster_rcnn_feature_cls_forward(
        params, images, boxes_per_image, pooled_box_feats, pooled_img_feats,
        MAX_SEQ, ROI_CLS, TEXT_CLS, NHEAD)

    jax.block_until_ready(roi_logits)
    for t in active_text_logits:
        jax.block_until_ready(t)

    assert roi_logits.shape == (B, ROI_CLS)
    assert all(t.shape[1] == TEXT_CLS for t in active_text_logits)
    print("KERNEL_OK")
</pallas_src>

<mosaic_0001>
module attributes {stable_mosaic.version = 11 : i64} {
  func.func @_two_mlp_head_kernel(%arg0: i32, %arg1: i32, %arg2: memref<12x7xf32, #tpu.memory_space<vmem>>, %arg3: memref<7x32xbf16, #tpu.memory_space<vmem>>, %arg4: memref<1x32xf32, #tpu.memory_space<vmem>>, %arg5: memref<32x32xbf16, #tpu.memory_space<vmem>>, %arg6: memref<1x32xf32, #tpu.memory_space<vmem>>, %arg7: memref<12x32xbf16, #tpu.memory_space<vmem>>, %arg8: memref<12x32xf32, #tpu.memory_space<vmem>>) attributes {dimension_semantics = [#tpu.dimension_semantics<parallel>, #tpu.dimension_semantics<arbitrary>], iteration_bounds = array<i64: 1, 1>, scalar_prefetch = 0 : i64, scratch_operands = 1 : i64, tpu.core_type = #tpu.core_type<tc>, window_params = [{transform_indices = @transform_0, window_bounds = array<i64: 12, 7>}, {transform_indices = @transform_1, window_bounds = array<i64: 7, 32>}, {pipeline_mode = #tpu.pipeline_mode<synchronous>, transform_indices = @transform_2, window_bounds = array<i64: 1, 32>}, {pipeline_mode = #tpu.pipeline_mode<synchronous>, transform_indices = @transform_3, window_bounds = array<i64: 32, 32>}, {pipeline_mode = #tpu.pipeline_mode<synchronous>, transform_indices = @transform_4, window_bounds = array<i64: 1, 32>}, {transform_indices = @transform_5, window_bounds = array<i64: 12, 32>}]} {
    %c0_i32 = arith.constant 0 : i32
    %0 = arith.cmpi eq, %arg1, %c0_i32 : i32
    %1 = arith.extui %0 : i1 to i32
    %c0_i32_0 = arith.constant 0 : i32
    %2 = arith.cmpi ne, %1, %c0_i32_0 : i32
    scf.if %2 {
      %cst_10 = arith.constant 0.000000e+00 : f32
      %13 = vector.broadcast %cst_10 : f32 to vector<12x32xf32>
      %c0_11 = arith.constant 0 : index
      %c0_12 = arith.constant 0 : index
      %14 = vector.load %arg8[%c0_11, %c0_12] : memref<12x32xf32, #tpu.memory_space<vmem>>, vector<12x32xf32>
      tpu.vector_store %arg8[%c0_11, %c0_12], %13 {strides = array<i32>} : memref<12x32xf32, #tpu.memory_space<vmem>>, vector<12x32xf32>,
    } else {
    }
    %c0 = arith.constant 0 : index
    %c0_1 = arith.constant 0 : index
    %3 = vector.load %arg8[%c0, %c0_1] : memref<12x32xf32, #tpu.memory_space<vmem>>, vector<12x32xf32>
    %c0_2 = arith.constant 0 : index
    %c0_3 = arith.constant 0 : index
    %4 = vector.load %arg2[%c0_2, %c0_3] : memref<12x7xf32, #tpu.memory_space<vmem>>, vector<12x7xf32>
    %5 = arith.truncf %4 : vector<12x7xf32> to vector<12x7xbf16>
    %c0_4 = arith.constant 0 : index
    %c0_5 = arith.constant 0 : index
    %6 = vector.load %arg3[%c0_4, %c0_5] : memref<7x32xbf16, #tpu.memory_space<vmem>>, vector<7x32xbf16>
    %cst = arith.constant dense<0.000000e+00> : vector<12x32xf32>
    %7 = tpu.matmul %5, %6, %cst {dimension_numbers = #tpu.dot_dimension_numbers<[1], [0], [0], [1], [0, 0, 1, 1], [], []>} : vector<12x7xbf16>, vector<7x32xbf16>, vector<12x32xf32> -> vector<12x32xf32>
    %8 = arith.addf %3, %7 : vector<12x32xf32>
    %c0_6 = arith.constant 0 : index
    %c0_7 = arith.constant 0 : index
    %9 = vector.load %arg8[%c0_6, %c0_7] : memref<12x32xf32, #tpu.memory_space<vmem>>, vector<12x32xf32>
    tpu.vector_store %arg8[%c0_6, %c0_7], %8 {strides = array<i32>} : memref<12x32xf32, #tpu.memory_space<vmem>>, vector<12x32xf32>,
    %c0_i32_8 = arith.constant 0 : i32
    %10 = arith.cmpi eq, %arg1, %c0_i32_8 : i32
    %11 = arith.extui %10 : i1 to i32
    %c0_i32_9 = arith.constant 0 : i32
    %12 = arith.cmpi ne, %11, %c0_i32_9 : i32
    scf.if %12 {
      %c0_10 = arith.constant 0 : index
      %c0_11 = arith.constant 0 : index
      %13 = vector.load %arg8[%c0_10, %c0_11] : memref<12x32xf32, #tpu.memory_space<vmem>>, vector<12x32xf32>
      %c0_12 = arith.constant 0 : index
      %c0_13 = arith.constant 0 : index
      %14 = vector.load %arg4[%c0_12, %c0_13] : memref<1x32xf32, #tpu.memory_space<vmem>>, vector<1x32xf32>
      %15 = vector.broadcast %14 : vector<1x32xf32> to vector<12x32xf32>
      %16 = arith.addf %13, %15 : vector<12x32xf32>
      %cst_14 = arith.constant 0.000000e+00 : f32
      %17 = vector.broadcast %cst_14 : f32 to vector<12x32xf32>
      %18 = arith.maximumf %16, %17 : vector<12x32xf32>
      %19 = arith.truncf %18 : vector<12x32xf32> to vector<12x32xbf16>
      %c0_15 = arith.constant 0 : index
      %c0_16 = arith.constant 0 : index
      %20 = vector.load %arg5[%c0_15, %c0_16] : memref<32x32xbf16, #tpu.memory_space<vmem>>, vector<32x32xbf16>
      %cst_17 = arith.constant dense<0.000000e+00> : vector<12x32xf32>
      %21 = tpu.matmul %19, %20, %cst_17 {dimension_numbers = #tpu.dot_dimension_numbers<[1], [0], [0], [1], [0, 0, 1, 1], [], []>} : vector<12x32xbf16>, vector<32x32xbf16>, vector<12x32xf32> -> vector<12x32xf32>
      %c0_18 = arith.constant 0 : index
      %c0_19 = arith.constant 0 : index
      %22 = vector.load %arg6[%c0_18, %c0_19] : memref<1x32xf32, #tpu.memory_space<vmem>>, vector<1x32xf32>
      %23 = vector.broadcast %22 : vector<1x32xf32> to vector<12x32xf32>
      %24 = arith.addf %21, %23 : vector<12x32xf32>
      %cst_20 = arith.constant 0.000000e+00 : f32
      %25 = vector.broadcast %cst_20 : f32 to vector<12x32xf32>
      %26 = arith.maximumf %24, %25 : vector<12x32xf32>
      %27 = arith.truncf %26 : vector<12x32xf32> to vector<12x32xbf16>
      %c0_21 = arith.constant 0 : index
      %c0_22 = arith.constant 0 : index
      %28 = vector.load %arg7[%c0_21, %c0_22] : memref<12x32xbf16, #tpu.memory_space<vmem>>, vector<12x32xbf16>
      tpu.vector_store %arg7[%c0_21, %c0_22], %27 {strides = array<i32>} : memref<12x32xbf16, #tpu.memory_space<vmem>>, vector<12x32xbf16>,
    } else {
    }
    return
  }
  func.func @transform_0(%arg0: i32, %arg1: i32) -> (i32, i32) {
    %c0_i32 = arith.constant 0 : i32
    return %arg0, %arg1 : i32, i32
  }
  func.func @transform_1(%arg0: i32, %arg1: i32) -> (i32, i32) {
    %c0_i32 = arith.constant 0 : i32
    %c0_i32_0 = arith.constant 0 : i32
    return %arg1, %c0_i32 : i32, i32
  }
  func.func @transform_2(%arg0: i32, %arg1: i32) -> (i32, i32) {
    %c0_i32 = arith.constant 0 : i32
    %c0_i32_0 = arith.constant 0 : i32
    %c0_i32_1 = arith.constant 0 : i32
    return %c0_i32, %c0_i32_0 : i32, i32
  }
  func.func @transform_3(%arg0: i32, %arg1: i32) -> (i32, i32) {
    %c0_i32 = arith.constant 0 : i32
    %c0_i32_0 = arith.constant 0 : i32
    %c0_i32_1 = arith.constant 0 : i32
    return %c0_i32, %c0_i32_0 : i32, i32
  }
  func.func @transform_4(%arg0: i32, %arg1: i32) -> (i32, i32) {
    %c0_i32 = arith.constant 0 : i32
    %c0_i32_0 = arith.constant 0 : i32
    %c0_i32_1 = arith.constant 0 : i32
    return %c0_i32, %c0_i32_0 : i32, i32
  }
  func.func @transform_5(%arg0: i32, %arg1: i32) -> (i32, i32) {
    %c0_i32 = arith.constant 0 : i32
    %c0_i32_0 = arith.constant 0 : i32
    return %arg0, %c0_i32 : i32, i32
  }
}

</mosaic_0001>

<llo_original>
// kernel: tpu_custom_call.1
$region0: #{tpu_custom_call.1}
  #allocation0 [shape = 'u32[]', space=smem, size = 0x4, offset = 0x4, fixed_abs, tag = 'smem constant byte address 0x4 - core index']
  #allocation1 [shape = 'u32[144,128]{1,0:T(1,128)}', space=vmem, size = 0x12000, scoped, tag = 'internal scratch']
  #allocation2 [shape = 'f32[12,32]{1,0:T(8,128)}', space=vmem, size = 0x2000, scoped, tag = 'scratch operand']
  %s0 = inlined_call_operand.vmem [shape: f32[12,7], index: 0, kind: input, shape index: {}]
  %s1 = inlined_call_operand.vmem [shape: bf16[7,32], index: 1, kind: input, shape index: {}]
  %s2 = inlined_call_operand.vmem [shape: f32[1,32], index: 2, kind: input, shape index: {}]
  %s3 = inlined_call_operand.vmem [shape: bf16[32,32], index: 3, kind: input, shape index: {}]
  %s4 = inlined_call_operand.vmem [shape: f32[1,32], index: 4, kind: input, shape index: {}]
  %s5 = inlined_call_operand.hbm [shape: bf16[12,32], index: 5, kind: output, shape index: {}]
  %s6 = sld [smem:[#allocation0]]
  $region38: #{tpu_custom_call.1} parent=0
    _
  %s8 = ssub.s32 1, %s6
  %s9 = scalar_select 0, %s8, %s6
  $region1: #{tpu_custom_call.1} parent=0
    #allocation3 [shape = 'u8[4096]{0}', space=vmem, size = 0x1000, scoped, tag = 'output window, operand 0, single buffered']
    #allocation4 [shape = 's32[1]{0}', space=sflag, size = 0x4, scoped, tag = 'scoped memory for tpu_custom_call.1']
    %10 = vsyncpa [#allocation4], 0
    // Predicated region
    $region2: #{tpu_custom_call.1} parent=1 // pred_check
      _
    $region3: #{tpu_custom_call.1} parent=1 // pred_check_branch
      %12 = sbr.rel (0) target = $region5
    $region4: #{tpu_custom_call.1} parent=1 // pred_region
      _
    $region5: #{tpu_custom_call.1} parent=1 // pred_fallthru
      _
    // Predicated region
    $region6: #{tpu_custom_call.1} parent=1 // pred_check
      _
    $region7: #{tpu_custom_call.1} parent=1 // pred_check_branch
      %14 = sbr.rel (0) target = $region9
    $region8: #{tpu_custom_call.1} parent=1 // pred_region
      _
    $region9: #{tpu_custom_call.1} parent=1 // pred_fallthru
      _
    // Predicated region
    $region10: #{tpu_custom_call.1} parent=1 // pred_check
      _
    $region11: #{tpu_custom_call.1} parent=1 // pred_check_branch
      %16 = sbr.rel (0) target = $region13
    $region12: #{tpu_custom_call.1} parent=1 // pred_region
      _
    $region13: #{tpu_custom_call.1} parent=1 // pred_fallthru
      _
    // Predicated region
    $region14: #{tpu_custom_call.1} parent=1 // pred_check
      _
    $region15: #{tpu_custom_call.1} parent=1 // pred_check_branch
      %18 = sbr.rel (0) target = $region17
    $region16: #{tpu_custom_call.1} parent=1 // pred_region
      _
    $region17: #{tpu_custom_call.1} parent=1 // pred_fallthru
      _
    // Predicated region
    $region18: #{tpu_custom_call.1} parent=1 // pred_check
      _
    $region19: #{tpu_custom_call.1} parent=1 // pred_check_branch
      %20 = sbr.rel (0) target = $region21
    $region20: #{tpu_custom_call.1} parent=1 // pred_region
      _
    $region21: #{tpu_custom_call.1} parent=1 // pred_fallthru
      _
    %p22 = scmp.eq.s32.totalorder 0, 0
    // Predicated region
    $region22: #{tpu_custom_call.1} parent=1 // pred_check
      %p23 = pneg %p22
    $region23: #{tpu_custom_call.1} parent=1 // pred_check_branch
      %25 = sbr.rel (%p23) target = $region25
    $region24: #{tpu_custom_call.1} parent=1 // pred_region
      %vm26 = vcmask 261120
      %27 = vst.msk [vmem:[#allocation2] sm:$0xff] %vm26, 0.0
      %vm28 = vcmask 257024
      %29 = vst.msk [vmem:[#allocation2 + $0x8] sm:$0xf] %vm28, 0.0
    $region25: #{tpu_custom_call.1} parent=1 // pred_fallthru
      _
    %v30 = vld [vmem:[#allocation2] sm:$0xff]
    %v31 = vld [vmem:[#allocation2 + $0x8] sm:$0xf]
    %v32 = vld [vmem:[%s0] sm:$0xff]
    %v33 = vld [vmem:[%s0 + $0x8] sm:$0xf]
    %v34 = vpack.c.bf16 %v33, %v32
    %v35 = vld [vmem:[%s1] sm:$0xf]
    %vm36 = vcmask 56320
    %v38 = vsel %vm36, %v34, 0
    %vm40 = vcmask 1042432
    %vm41 = vcmask 1043456
    %v42 = vsel %vm40, 4294967295, 65535
    %v43 = vsel %vm41, %v42, 0
    %v45 = vand.u32 %v35, %v43
    %47 = vmatprep.subr.bf16.mxu0 0
    %48 = vmatpush1.bf16.msra.mxu0 %v45
    %49 = vmatprep.subr.bf16.mxu0 0
    %50 = vmatpush1.bf16.msra.mxu0 0
    %51 = vmatprep.subr.bf16.mxu0 0
    %52 = vmatpush1.bf16.msra.mxu0 0
    %53 = vmatprep.subr.bf16.mxu0 0
    %54 = vmatpush1.bf16.msra.mxu0 0
    %55 = vmatprep.subr.bf16.mxu0 0
    %56 = vmatpush1.bf16.msra.mxu0 0
    %57 = vmatprep.subr.bf16.mxu0 0
    %58 = vmatpush1.bf16.msra.mxu0 0
    %59 = vmatprep.subr.bf16.mxu0 0
    %60 = vmatpush1.bf16.msra.mxu0 0
    %61 = vmatprep.subr.bf16.mxu0 0
    %62 = vmatpush1.bf16.msra.mxu0 0
    %63 = vmatprep.subr.bf16.mxu0 0
    %64 = vmatpush1.bf16.msra.mxu0 0
    %65 = vmatprep.subr.bf16.mxu0 0
    %66 = vmatpush1.bf16.msra.mxu0 0
    %67 = vmatprep.subr.bf16.mxu0 0
    %68 = vmatpush1.bf16.msra.mxu0 0
    %69 = vmatprep.subr.bf16.mxu0 0
    %70 = vmatpush1.bf16.msra.mxu0 0
    %71 = vmatprep.subr.bf16.mxu0 0
    %72 = vmatpush1.bf16.msra.mxu0 0
    %73 = vmatprep.subr.bf16.mxu0 0
    %74 = vmatpush1.bf16.msra.mxu0 0
    %75 = vmatprep.subr.bf16.mxu0 0
    %76 = vmatpush1.bf16.msra.mxu0 0
    %77 = vmatprep.subr.bf16.mxu0 0
    %78 = vmatpush1.bf16.msra.mxu0 0
    %79 = vmatprep.mubr.bf16.mxu0 0
    %80 = vmatmul.mubr.bf16.gmra.mrb[0].mxu0 %v38
    %v81 = vpop.f32.mrb[0].mxu0
    %v82 = vadd.f32 0.0, %v81
    %v83 = vpop.f32.mrb[0].mxu0
    %v84 = vpop.f32.mrb[0].mxu0
    %v85 = vadd.f32 0.0, %v84
    %v86 = vpop.f32.mrb[0].mxu0
    %87 = vdwg.mxu0
    %v88 = vadd.f32 %v30, %v82
    %v89 = vadd.f32 %v31, %v85
    %vm90 = vcmask 261120
    %91 = vst.msk [vmem:[#allocation2] sm:$0xff] %vm90, %v88
    %vm92 = vcmask 257024
    %93 = vst.msk [vmem:[#allocation2 + $0x8] sm:$0xf] %vm92, %v89
    // Predicated region
    $region26: #{tpu_custom_call.1} parent=1 // pred_check
      %p94 = pneg %p22
    $region27: #{tpu_custom_call.1} parent=1 // pred_check_branch
      %96 = sbr.rel (%p94) target = $region29
    $region28: #{tpu_custom_call.1} parent=1 // pred_region
      %v97 = vld [vmem:[#allocation2] sm:$0xff]
      %v98 = vld [vmem:[#allocation2 + $0x8] sm:$0xf]
      %v99 = vld [vmem:[%s2] sm:$0x1]
      %v101 = vlaneseq
      %v102 = vshrl.u32 %v101, 7
      %v103 = vsub.s32 0, %v102
      %v104 = vrot.slane %v99, %v103
      %v106 = vadd.f32 %v97, %v104
      %v107 = vadd.f32 %v98, %v104
      %v108 = vmax.f32 %v106, 0.0
      %v109 = vmax.f32 %v107, 0.0
      %v110 = vpack.c.bf16 %v109, %v108
      %v111 = vld [vmem:[%s3] sm:$0xf]
      %v112 = vld [vmem:[%s3 + $0x4] sm:$0xf]
      %v113 = vld [vmem:[%s3 + $0x8] sm:$0xf]
      %v114 = vld [vmem:[%s3 + $0xc] sm:$0xf]
      %v115 = vld [vmem:[%s4] sm:$0x1]
      %v117 = vlaneseq
      %v118 = vshrl.u32 %v117, 7
      %v119 = vsub.s32 0, %v118
      %v120 = vrot.slane %v115, %v119
      %v126 = vunpack.c.l.b16 %v111
      %v127 = vunpack.c.l.b16 %v112
      %v128 = vunpack.c.l.b16 %v113
      %v129 = vunpack.c.l.b16 %v114
      %v130 = vpack.c.b16 %v127, %v126
      %v131 = vpack.c.b16 %v129, %v128
      %v135 = vsel %vm90, %v110, 0
      %137 = vmatprep.subr.bf16.mxu0 0
      %138 = vmatpush1.bf16.msra.mxu0 %v130
      %139 = vmatprep.subr.bf16.mxu0 0
      %140 = vmatpush1.bf16.msra.mxu0 %v131
      %141 = vmatprep.subr.bf16.mxu0 0
      %142 = vmatpush1.bf16.msra.mxu0 0
      %143 = vmatprep.subr.bf16.mxu0 0
      %144 = vmatpush1.bf16.msra.mxu0 0
      %145 = vmatprep.subr.bf16.mxu0 0
      %146 = vmatpush1.bf16.msra.mxu0 0
      %147 = vmatprep.subr.bf16.mxu0 0
      %148 = vmatpush1.bf16.msra.mxu0 0
      %149 = vmatprep.subr.bf16.mxu0 0
      %150 = vmatpush1.bf16.msra.mxu0 0
      %151 = vmatprep.subr.bf16.mxu0 0
      %152 = vmatpush1.bf16.msra.mxu0 0
      %153 = vmatprep.subr.bf16.mxu0 0
      %154 = vmatpush1.bf16.msra.mxu0 0
      %155 = vmatprep.subr.bf16.mxu0 0
      %156 = vmatpush1.bf16.msra.mxu0 0
      %157 = vmatprep.subr.bf16.mxu0 0
      %158 = vmatpush1.bf16.msra.mxu0 0
      %159 = vmatprep.subr.bf16.mxu0 0
      %160 = vmatpush1.bf16.msra.mxu0 0
      %161 = vmatprep.subr.bf16.mxu0 0
      %162 = vmatpush1.bf16.msra.mxu0 0
      %163 = vmatprep.subr.bf16.mxu0 0
      %164 = vmatpush1.bf16.msra.mxu0 0
      %165 = vmatprep.subr.bf16.mxu0 0
      %166 = vmatpush1.bf16.msra.mxu0 0
      %167 = vmatprep.subr.bf16.mxu0 0
      %168 = vmatpush1.bf16.msra.mxu0 0
      %169 = vmatprep.mubr.bf16.mxu0 0
      %170 = vmatmul.mubr.bf16.gmra.mrb[0].mxu0 %v135
      %v171 = vpop.f32.mrb[0].mxu0
      %v172 = vadd.f32 %v120, %v171
      %v173 = vpop.f32.mrb[0].mxu0
      %v174 = vpop.f32.mrb[0].mxu0
      %v175 = vadd.f32 %v120, %v174
      %v176 = vpop.f32.mrb[0].mxu0
      %177 = vdwg.mxu0
      %v178 = vmax.f32 %v172, 0.0
      %v179 = vmax.f32 %v175, 0.0
      %v180 = vpack.c.bf16 %v179, %v178
      %v182 = vunpack.c.l.b16 %v180
      %v183 = vunpack.c.h.b16 %v180
      %v184 = vpack.c.b16 %v182, %v182
      %v185 = vpack.c.b16 %v183, %v183
      %188 = vst.msk [vmem:[#allocation3] sm:$0xf] %vm92, %v184
      %vm189 = vcmask 254976
      %190 = vst.msk [vmem:[#allocation3 + $0x4] sm:$0x3] %vm189, %v185
    $region29: #{tpu_custom_call.1} parent=1 // pred_fallthru
      _
    // Predicated region
    $region30: #{tpu_custom_call.1} parent=1 // pred_check
      _
    $region31: #{tpu_custom_call.1} parent=1 // pred_check_branch
      %192 = sbr.rel (0) target = $region33
    $region32: #{tpu_custom_call.1} parent=1 // pred_region
      %s194 = ssub.s32 128, 128
      %195 = vsyncadd [#allocation4], %s194
      %s196 = sshll.u32 [#allocation3], 4
      %s197 = int_to_ptr.vmem [resolvable:$true] %s196
      %202 = dma.vmem_to_hbm [thread:$0]  %s197, 128, %s5, [#allocation4], 64, 64, 4
    $region33: #{tpu_custom_call.1} parent=1 // pred_fallthru
      _
    // Predicated region
    $region34: #{tpu_custom_call.1} parent=1 // pred_check
      _
    $region35: #{tpu_custom_call.1} parent=1 // pred_check_branch
      %204 = sbr.rel (0) target = $region37
    $region36: #{tpu_custom_call.1} parent=1 // pred_region
      %205 = dma.done [#allocation4], 128
    $region37: #{tpu_custom_call.1} parent=1 // pred_fallthru
      _
    %206 = vsyncpa [#allocation4], 1

</llo_original>
